<compile_context>
chip_gen: v5e
topology: v5e:2x2
jax: 0.10.0
libtpu: 0.0.40
codegen_flags: <defaults>
</compile_context>

<pallas_src>
import jax
import jax.numpy as jnp
from jax.experimental import pallas as pl
from jax.experimental.pallas import tpu as pltpu

INPUT_DIM = 6
LATENT_DIM = 2
H1 = 9   # encoder hidden 1 / decoder hidden 2
H2 = 6   # encoder hidden 2 / decoder hidden 1

NL = 6          # packed layers: enc1, enc2, heads(mu||logvar), dec1, dec2, dec3
PR, PC = 16, 16  # padded slab size per layer: [out, in | bias-col] fits in 16x16
OUT_ROWS = INPUT_DIM + 2 * LATENT_DIM  # 10: recon(6) || mu(2) || logvar(2)


def _round_up(n, m):
    return ((n + m - 1) // m) * m


def _vae_kernel(x_ref, eps_ref, p_ref, out_ref):
    """x_ref: [6, T], eps_ref: [2, T], p_ref: [NL, PR, PC], out_ref: [10, T]."""
    T = x_ref.shape[1]
    x = x_ref[...]        # [6, T]
    eps = eps_ref[...]    # [2, T]

    def dense(layer_idx, inp, n_out, n_in):
        # y[n, b] = bias[n] + sum_k W[n, k] * inp[k, b]
        # Unrolled VPU broadcast-FMAs; contraction dims (<=9) are far too small
        # for the MXU, and batch is lane-dense so every op uses full 128 lanes.
        slab = p_ref[layer_idx]                                   # [PR, PC]
        acc = jnp.broadcast_to(slab[:n_out, n_in:n_in + 1], (n_out, T))  # bias
        for k in range(n_in):
            acc = acc + slab[:n_out, k:k + 1] * inp[k:k + 1, :]
        return acc

    # ---- encoder: Linear(6,9)+ReLU, Linear(9,6)+ReLU ----
    h = jnp.maximum(dense(0, x, H1, INPUT_DIM), 0.0)              # [9, T]
    h = jnp.maximum(dense(1, h, H2, H1), 0.0)                     # [6, T]

    # ---- fused latent heads: rows 0:2 = mu, rows 2:4 = logvar ----
    heads = dense(2, h, 2 * LATENT_DIM, H2)                       # [4, T]
    mu = heads[:LATENT_DIM, :]
    logvar = heads[LATENT_DIM:, :]

    # ---- reparameterize: z = mu + eps * exp(0.5 * logvar) ----
    z = mu + eps * jnp.exp(0.5 * logvar)                          # [2, T]

    # ---- decoder: Linear(2,6)+ReLU, Linear(6,9)+ReLU, Linear(9,6) ----
    d = jnp.maximum(dense(3, z, H2, LATENT_DIM), 0.0)             # [6, T]
    d = jnp.maximum(dense(4, d, H1, H2), 0.0)                     # [9, T]
    recon = dense(5, d, INPUT_DIM, H1)                            # [6, T]

    # single fused, lane-dense output slab
    out_ref[0:INPUT_DIM, :] = recon
    out_ref[INPUT_DIM:INPUT_DIM + LATENT_DIM, :] = mu
    out_ref[INPUT_DIM + LATENT_DIM:OUT_ROWS, :] = logvar


def pack_params(p):
    """Pack all weights/biases into one [NL, PR, PC] f32 buffer.

    Each slab l holds W (PyTorch convention [out, in]) in [:out, :in] and the
    bias in column `in`. mu/logvar heads are concatenated into one slab."""
    w_heads = jnp.concatenate([p["wmu"], p["wlv"]], axis=0)   # [4, 6]
    b_heads = jnp.concatenate([p["bmu"], p["blv"]], axis=0)   # [4]
    layers = [
        (p["we1"], p["be1"]),   # [9, 6]
        (p["we2"], p["be2"]),   # [6, 9]
        (w_heads, b_heads),     # [4, 6]
        (p["wd1"], p["bd1"]),   # [6, 2]
        (p["wd2"], p["bd2"]),   # [9, 6]
        (p["wd3"], p["bd3"]),   # [6, 9]
    ]
    packed = jnp.zeros((NL, PR, PC), jnp.float32)
    for l, (w, b) in enumerate(layers):
        n_out, n_in = w.shape
        packed = packed.at[l, :n_out, :n_in].set(w)
        packed = packed.at[l, :n_out, n_in].set(b)
    return packed


def vae_forward(x, eps, params, tile_b=1024):
    """x: [B, INPUT_DIM] f32, eps: [B, LATENT_DIM] f32.
    params: PyTorch-shape weights W [out, in] and biases b [out]."""
    B = x.shape[0]
    tile_b = min(tile_b, _round_up(B, 128))      # lane-dense batch tile
    b_pad = _round_up(B, tile_b)
    pad = b_pad - B

    # batch on lanes: [features, B_pad]
    x_t = jnp.pad(x.astype(jnp.float32).T, ((0, 0), (0, pad)))
    eps_t = jnp.pad(eps.astype(jnp.float32).T, ((0, 0), (0, pad)))
    p_packed = pack_params(params)

    grid = (b_pad // tile_b,)
    macs = H1 * INPUT_DIM + H2 * H1 + 2 * LATENT_DIM * H2 \
        + H2 * LATENT_DIM + H1 * H2 + INPUT_DIM * H1           # 252 MAC / sample
    cost = pl.CostEstimate(
        flops=2 * macs * b_pad,
        transcendentals=LATENT_DIM * b_pad,
        bytes_accessed=4 * b_pad * (INPUT_DIM + LATENT_DIM + OUT_ROWS)
        + int(p_packed.size) * 4,
    )

    out_t = pl.pallas_call(
        _vae_kernel,
        out_shape=jax.ShapeDtypeStruct((OUT_ROWS, b_pad), jnp.float32),
        grid=grid,
        in_specs=[
            pl.BlockSpec((INPUT_DIM, tile_b), lambda i: (0, i)),   # x
            pl.BlockSpec((LATENT_DIM, tile_b), lambda i: (0, i)),  # eps
            pl.BlockSpec((NL, PR, PC), lambda i: (0, 0, 0)),       # packed params
        ],
        out_specs=pl.BlockSpec((OUT_ROWS, tile_b), lambda i: (0, i)),
        compiler_params=pltpu.CompilerParams(
            dimension_semantics=("parallel",)),
        cost_estimate=cost,
    )(x_t, eps_t, p_packed)

    recon = out_t[0:INPUT_DIM, :B].T
    mu = out_t[INPUT_DIM:INPUT_DIM + LATENT_DIM, :B].T
    logvar = out_t[INPUT_DIM + LATENT_DIM:OUT_ROWS, :B].T
    return recon, mu, logvar


def init_params(key):
    """Deterministic synthetic init; PyTorch nn.Linear shapes: W [out, in], b [out]."""
    def lin(k, fan_in, fan_out):
        kw, kb = jax.random.split(k)
        bound = 1.0 / (fan_in ** 0.5)
        w = jax.random.uniform(kw, (fan_out, fan_in), jnp.float32, -bound, bound)
        b = jax.random.uniform(kb, (fan_out,), jnp.float32, -bound, bound)
        return w, b

    keys = jax.random.split(key, 7)
    we1, be1 = lin(keys[0], INPUT_DIM, H1)      # encoder Linear(6, 9)
    we2, be2 = lin(keys[1], H1, H2)             # encoder Linear(9, 6)
    wmu, bmu = lin(keys[2], H2, LATENT_DIM)     # fc_mu Linear(6, 2)
    wlv, blv = lin(keys[3], H2, LATENT_DIM)     # fc_logvar Linear(6, 2)
    wd1, bd1 = lin(keys[4], LATENT_DIM, H2)     # decoder Linear(2, 6)
    wd2, bd2 = lin(keys[5], H2, H1)             # decoder Linear(6, 9)
    wd3, bd3 = lin(keys[6], H1, INPUT_DIM)      # decoder Linear(9, 6)
    return dict(we1=we1, be1=be1, we2=we2, be2=be2,
                wmu=wmu, bmu=bmu, wlv=wlv, blv=blv,
                wd1=wd1, bd1=bd1, wd2=wd2, bd2=bd2, wd3=wd3, bd3=bd3)


def vae_reference(x, eps, p):
    """Pure-JAX reference mirroring the PyTorch forward (W is [out, in])."""
    h = jnp.maximum(x @ p["we1"].T + p["be1"], 0.0)
    h = jnp.maximum(h @ p["we2"].T + p["be2"], 0.0)
    mu = h @ p["wmu"].T + p["bmu"]
    logvar = h @ p["wlv"].T + p["blv"]
    z = mu + eps * jnp.exp(0.5 * logvar)
    d = jnp.maximum(z @ p["wd1"].T + p["bd1"], 0.0)
    d = jnp.maximum(d @ p["wd2"].T + p["bd2"], 0.0)
    recon = d @ p["wd3"].T + p["bd3"]
    return recon, mu, logvar


if __name__ == "__main__":
    key = jax.random.PRNGKey(0)
    k_param, k_x, k_eps = jax.random.split(key, 3)

    B = 8  # small batch (kernel pads to a lane-dense multiple of 128 internally)
    params = init_params(k_param)
    x = jax.random.normal(k_x, (B, INPUT_DIM), jnp.float32)
    eps = jax.random.normal(k_eps, (B, LATENT_DIM), jnp.float32)  # torch.randn_like stand-in

    recon, mu, logvar = jax.block_until_ready(vae_forward(x, eps, params))

    # sanity-check against pure-JAX reference
    r_ref, mu_ref, lv_ref = vae_reference(x, eps, params)
    assert jnp.allclose(recon, r_ref, atol=1e-5, rtol=1e-5)
    assert jnp.allclose(mu, mu_ref, atol=1e-5, rtol=1e-5)
    assert jnp.allclose(logvar, lv_ref, atol=1e-5, rtol=1e-5)

    print("KERNEL_OK")
</pallas_src>

<mosaic_0001>
module attributes {stable_mosaic.version = 11 : i64} {
  func.func @_vae_kernel(%arg0: i32, %arg1: memref<6x128xf32, #tpu.memory_space<vmem>>, %arg2: memref<2x128xf32, #tpu.memory_space<vmem>>, %arg3: memref<6x16x16xf32, #tpu.memory_space<vmem>>, %arg4: memref<10x128xf32, #tpu.memory_space<vmem>>) attributes {dimension_semantics = [#tpu.dimension_semantics<parallel>], iteration_bounds = array<i64: 1>, scalar_prefetch = 0 : i64, scratch_operands = 0 : i64, tpu.core_type = #tpu.core_type<tc>, window_params = [{transform_indices = @transform_0, window_bounds = array<i64: 6, 128>}, {transform_indices = @transform_1, window_bounds = array<i64: 2, 128>}, {pipeline_mode = #tpu.pipeline_mode<synchronous>, transform_indices = @transform_2, window_bounds = array<i64: 6, 16, 16>}, {transform_indices = @transform_3, window_bounds = array<i64: 10, 128>}]} {
    %c0 = arith.constant 0 : index
    %c0_0 = arith.constant 0 : index
    %0 = vector.load %arg1[%c0, %c0_0] : memref<6x128xf32, #tpu.memory_space<vmem>>, vector<6x128xf32>
    %c0_1 = arith.constant 0 : index
    %c0_2 = arith.constant 0 : index
    %1 = vector.load %arg2[%c0_1, %c0_2] : memref<2x128xf32, #tpu.memory_space<vmem>>, vector<2x128xf32>
    %c0_3 = arith.constant 0 : index
    %c0_4 = arith.constant 0 : index
    %c0_5 = arith.constant 0 : index
    %2 = vector.load %arg3[%c0_3, %c0_4, %c0_5] : memref<6x16x16xf32, #tpu.memory_space<vmem>>, vector<1x16x16xf32>
    %3 = vector.shape_cast %2 : vector<1x16x16xf32> to vector<16x16xf32>
    %4 = vector.extract_strided_slice %3 {offsets = [0, 6], sizes = [9, 1], strides = [1, 1]} : vector<16x16xf32> to vector<9x1xf32>
    %5 = vector.shape_cast %4 : vector<9x1xf32> to vector<9x1xf32>
    %6 = vector.broadcast %5 : vector<9x1xf32> to vector<9x128xf32>
    %7 = vector.extract_strided_slice %3 {offsets = [0, 0], sizes = [9, 1], strides = [1, 1]} : vector<16x16xf32> to vector<9x1xf32>
    %8 = vector.extract_strided_slice %0 {offsets = [0, 0], sizes = [1, 128], strides = [1, 1]} : vector<6x128xf32> to vector<1x128xf32>
    %9 = vector.broadcast %7 : vector<9x1xf32> to vector<9x128xf32>
    %10 = vector.broadcast %8 : vector<1x128xf32> to vector<9x128xf32>
    %11 = arith.mulf %9, %10 : vector<9x128xf32>
    %12 = arith.addf %6, %11 : vector<9x128xf32>
    %13 = vector.extract_strided_slice %3 {offsets = [0, 1], sizes = [9, 1], strides = [1, 1]} : vector<16x16xf32> to vector<9x1xf32>
    %14 = vector.extract_strided_slice %0 {offsets = [1, 0], sizes = [1, 128], strides = [1, 1]} : vector<6x128xf32> to vector<1x128xf32>
    %15 = vector.broadcast %13 : vector<9x1xf32> to vector<9x128xf32>
    %16 = vector.broadcast %14 : vector<1x128xf32> to vector<9x128xf32>
    %17 = arith.mulf %15, %16 : vector<9x128xf32>
    %18 = arith.addf %12, %17 : vector<9x128xf32>
    %19 = vector.extract_strided_slice %3 {offsets = [0, 2], sizes = [9, 1], strides = [1, 1]} : vector<16x16xf32> to vector<9x1xf32>
    %20 = vector.extract_strided_slice %0 {offsets = [2, 0], sizes = [1, 128], strides = [1, 1]} : vector<6x128xf32> to vector<1x128xf32>
    %21 = vector.broadcast %19 : vector<9x1xf32> to vector<9x128xf32>
    %22 = vector.broadcast %20 : vector<1x128xf32> to vector<9x128xf32>
    %23 = arith.mulf %21, %22 : vector<9x128xf32>
    %24 = arith.addf %18, %23 : vector<9x128xf32>
    %25 = vector.extract_strided_slice %3 {offsets = [0, 3], sizes = [9, 1], strides = [1, 1]} : vector<16x16xf32> to vector<9x1xf32>
    %26 = vector.extract_strided_slice %0 {offsets = [3, 0], sizes = [1, 128], strides = [1, 1]} : vector<6x128xf32> to vector<1x128xf32>
    %27 = vector.broadcast %25 : vector<9x1xf32> to vector<9x128xf32>
    %28 = vector.broadcast %26 : vector<1x128xf32> to vector<9x128xf32>
    %29 = arith.mulf %27, %28 : vector<9x128xf32>
    %30 = arith.addf %24, %29 : vector<9x128xf32>
    %31 = vector.extract_strided_slice %3 {offsets = [0, 4], sizes = [9, 1], strides = [1, 1]} : vector<16x16xf32> to vector<9x1xf32>
    %32 = vector.extract_strided_slice %0 {offsets = [4, 0], sizes = [1, 128], strides = [1, 1]} : vector<6x128xf32> to vector<1x128xf32>
    %33 = vector.broadcast %31 : vector<9x1xf32> to vector<9x128xf32>
    %34 = vector.broadcast %32 : vector<1x128xf32> to vector<9x128xf32>
    %35 = arith.mulf %33, %34 : vector<9x128xf32>
    %36 = arith.addf %30, %35 : vector<9x128xf32>
    %37 = vector.extract_strided_slice %3 {offsets = [0, 5], sizes = [9, 1], strides = [1, 1]} : vector<16x16xf32> to vector<9x1xf32>
    %38 = vector.extract_strided_slice %0 {offsets = [5, 0], sizes = [1, 128], strides = [1, 1]} : vector<6x128xf32> to vector<1x128xf32>
    %39 = vector.broadcast %37 : vector<9x1xf32> to vector<9x128xf32>
    %40 = vector.broadcast %38 : vector<1x128xf32> to vector<9x128xf32>
    %41 = arith.mulf %39, %40 : vector<9x128xf32>
    %42 = arith.addf %36, %41 : vector<9x128xf32>
    %cst = arith.constant 0.000000e+00 : f32
    %43 = vector.broadcast %cst : f32 to vector<9x128xf32>
    %44 = arith.maximumf %42, %43 : vector<9x128xf32>
    %c1 = arith.constant 1 : index
    %c0_6 = arith.constant 0 : index
    %c0_7 = arith.constant 0 : index
    %45 = vector.load %arg3[%c1, %c0_6, %c0_7] : memref<6x16x16xf32, #tpu.memory_space<vmem>>, vector<1x16x16xf32>
    %46 = vector.shape_cast %45 : vector<1x16x16xf32> to vector<16x16xf32>
    %47 = vector.extract_strided_slice %46 {offsets = [0, 9], sizes = [6, 1], strides = [1, 1]} : vector<16x16xf32> to vector<6x1xf32>
    %48 = vector.shape_cast %47 : vector<6x1xf32> to vector<6x1xf32>
    %49 = vector.broadcast %48 : vector<6x1xf32> to vector<6x128xf32>
    %50 = vector.extract_strided_slice %46 {offsets = [0, 0], sizes = [6, 1], strides = [1, 1]} : vector<16x16xf32> to vector<6x1xf32>
    %51 = vector.extract_strided_slice %44 {offsets = [0, 0], sizes = [1, 128], strides = [1, 1]} : vector<9x128xf32> to vector<1x128xf32>
    %52 = vector.broadcast %50 : vector<6x1xf32> to vector<6x128xf32>
    %53 = vector.broadcast %51 : vector<1x128xf32> to vector<6x128xf32>
    %54 = arith.mulf %52, %53 : vector<6x128xf32>
    %55 = arith.addf %49, %54 : vector<6x128xf32>
    %56 = vector.extract_strided_slice %46 {offsets = [0, 1], sizes = [6, 1], strides = [1, 1]} : vector<16x16xf32> to vector<6x1xf32>
    %57 = vector.extract_strided_slice %44 {offsets = [1, 0], sizes = [1, 128], strides = [1, 1]} : vector<9x128xf32> to vector<1x128xf32>
    %58 = vector.broadcast %56 : vector<6x1xf32> to vector<6x128xf32>
    %59 = vector.broadcast %57 : vector<1x128xf32> to vector<6x128xf32>
    %60 = arith.mulf %58, %59 : vector<6x128xf32>
    %61 = arith.addf %55, %60 : vector<6x128xf32>
    %62 = vector.extract_strided_slice %46 {offsets = [0, 2], sizes = [6, 1], strides = [1, 1]} : vector<16x16xf32> to vector<6x1xf32>
    %63 = vector.extract_strided_slice %44 {offsets = [2, 0], sizes = [1, 128], strides = [1, 1]} : vector<9x128xf32> to vector<1x128xf32>
    %64 = vector.broadcast %62 : vector<6x1xf32> to vector<6x128xf32>
    %65 = vector.broadcast %63 : vector<1x128xf32> to vector<6x128xf32>
    %66 = arith.mulf %64, %65 : vector<6x128xf32>
    %67 = arith.addf %61, %66 : vector<6x128xf32>
    %68 = vector.extract_strided_slice %46 {offsets = [0, 3], sizes = [6, 1], strides = [1, 1]} : vector<16x16xf32> to vector<6x1xf32>
    %69 = vector.extract_strided_slice %44 {offsets = [3, 0], sizes = [1, 128], strides = [1, 1]} : vector<9x128xf32> to vector<1x128xf32>
    %70 = vector.broadcast %68 : vector<6x1xf32> to vector<6x128xf32>
    %71 = vector.broadcast %69 : vector<1x128xf32> to vector<6x128xf32>
    %72 = arith.mulf %70, %71 : vector<6x128xf32>
    %73 = arith.addf %67, %72 : vector<6x128xf32>
    %74 = vector.extract_strided_slice %46 {offsets = [0, 4], sizes = [6, 1], strides = [1, 1]} : vector<16x16xf32> to vector<6x1xf32>
    %75 = vector.extract_strided_slice %44 {offsets = [4, 0], sizes = [1, 128], strides = [1, 1]} : vector<9x128xf32> to vector<1x128xf32>
    %76 = vector.broadcast %74 : vector<6x1xf32> to vector<6x128xf32>
    %77 = vector.broadcast %75 : vector<1x128xf32> to vector<6x128xf32>
    %78 = arith.mulf %76, %77 : vector<6x128xf32>
    %79 = arith.addf %73, %78 : vector<6x128xf32>
    %80 = vector.extract_strided_slice %46 {offsets = [0, 5], sizes = [6, 1], strides = [1, 1]} : vector<16x16xf32> to vector<6x1xf32>
    %81 = vector.extract_strided_slice %44 {offsets = [5, 0], sizes = [1, 128], strides = [1, 1]} : vector<9x128xf32> to vector<1x128xf32>
    %82 = vector.broadcast %80 : vector<6x1xf32> to vector<6x128xf32>
    %83 = vector.broadcast %81 : vector<1x128xf32> to vector<6x128xf32>
    %84 = arith.mulf %82, %83 : vector<6x128xf32>
    %85 = arith.addf %79, %84 : vector<6x128xf32>
    %86 = vector.extract_strided_slice %46 {offsets = [0, 6], sizes = [6, 1], strides = [1, 1]} : vector<16x16xf32> to vector<6x1xf32>
    %87 = vector.extract_strided_slice %44 {offsets = [6, 0], sizes = [1, 128], strides = [1, 1]} : vector<9x128xf32> to vector<1x128xf32>
    %88 = vector.broadcast %86 : vector<6x1xf32> to vector<6x128xf32>
    %89 = vector.broadcast %87 : vector<1x128xf32> to vector<6x128xf32>
    %90 = arith.mulf %88, %89 : vector<6x128xf32>
    %91 = arith.addf %85, %90 : vector<6x128xf32>
    %92 = vector.extract_strided_slice %46 {offsets = [0, 7], sizes = [6, 1], strides = [1, 1]} : vector<16x16xf32> to vector<6x1xf32>
    %93 = vector.extract_strided_slice %44 {offsets = [7, 0], sizes = [1, 128], strides = [1, 1]} : vector<9x128xf32> to vector<1x128xf32>
    %94 = vector.broadcast %92 : vector<6x1xf32> to vector<6x128xf32>
    %95 = vector.broadcast %93 : vector<1x128xf32> to vector<6x128xf32>
    %96 = arith.mulf %94, %95 : vector<6x128xf32>
    %97 = arith.addf %91, %96 : vector<6x128xf32>
    %98 = vector.extract_strided_slice %46 {offsets = [0, 8], sizes = [6, 1], strides = [1, 1]} : vector<16x16xf32> to vector<6x1xf32>
    %99 = vector.extract_strided_slice %44 {offsets = [8, 0], sizes = [1, 128], strides = [1, 1]} : vector<9x128xf32> to vector<1x128xf32>
    %100 = vector.broadcast %98 : vector<6x1xf32> to vector<6x128xf32>
    %101 = vector.broadcast %99 : vector<1x128xf32> to vector<6x128xf32>
    %102 = arith.mulf %100, %101 : vector<6x128xf32>
    %103 = arith.addf %97, %102 : vector<6x128xf32>
    %cst_8 = arith.constant 0.000000e+00 : f32
    %104 = vector.broadcast %cst_8 : f32 to vector<6x128xf32>
    %105 = arith.maximumf %103, %104 : vector<6x128xf32>
    %c2 = arith.constant 2 : index
    %c0_9 = arith.constant 0 : index
    %c0_10 = arith.constant 0 : index
    %106 = vector.load %arg3[%c2, %c0_9, %c0_10] : memref<6x16x16xf32, #tpu.memory_space<vmem>>, vector<1x16x16xf32>
    %107 = vector.shape_cast %106 : vector<1x16x16xf32> to vector<16x16xf32>
    %108 = vector.extract_strided_slice %107 {offsets = [0, 6], sizes = [4, 1], strides = [1, 1]} : vector<16x16xf32> to vector<4x1xf32>
    %109 = vector.shape_cast %108 : vector<4x1xf32> to vector<4x1xf32>
    %110 = vector.broadcast %109 : vector<4x1xf32> to vector<4x128xf32>
    %111 = vector.extract_strided_slice %107 {offsets = [0, 0], sizes = [4, 1], strides = [1, 1]} : vector<16x16xf32> to vector<4x1xf32>
    %112 = vector.extract_strided_slice %105 {offsets = [0, 0], sizes = [1, 128], strides = [1, 1]} : vector<6x128xf32> to vector<1x128xf32>
    %113 = vector.broadcast %111 : vector<4x1xf32> to vector<4x128xf32>
    %114 = vector.broadcast %112 : vector<1x128xf32> to vector<4x128xf32>
    %115 = arith.mulf %113, %114 : vector<4x128xf32>
    %116 = arith.addf %110, %115 : vector<4x128xf32>
    %117 = vector.extract_strided_slice %107 {offsets = [0, 1], sizes = [4, 1], strides = [1, 1]} : vector<16x16xf32> to vector<4x1xf32>
    %118 = vector.extract_strided_slice %105 {offsets = [1, 0], sizes = [1, 128], strides = [1, 1]} : vector<6x128xf32> to vector<1x128xf32>
    %119 = vector.broadcast %117 : vector<4x1xf32> to vector<4x128xf32>
    %120 = vector.broadcast %118 : vector<1x128xf32> to vector<4x128xf32>
    %121 = arith.mulf %119, %120 : vector<4x128xf32>
    %122 = arith.addf %116, %121 : vector<4x128xf32>
    %123 = vector.extract_strided_slice %107 {offsets = [0, 2], sizes = [4, 1], strides = [1, 1]} : vector<16x16xf32> to vector<4x1xf32>
    %124 = vector.extract_strided_slice %105 {offsets = [2, 0], sizes = [1, 128], strides = [1, 1]} : vector<6x128xf32> to vector<1x128xf32>
    %125 = vector.broadcast %123 : vector<4x1xf32> to vector<4x128xf32>
    %126 = vector.broadcast %124 : vector<1x128xf32> to vector<4x128xf32>
    %127 = arith.mulf %125, %126 : vector<4x128xf32>
    %128 = arith.addf %122, %127 : vector<4x128xf32>
    %129 = vector.extract_strided_slice %107 {offsets = [0, 3], sizes = [4, 1], strides = [1, 1]} : vector<16x16xf32> to vector<4x1xf32>
    %130 = vector.extract_strided_slice %105 {offsets = [3, 0], sizes = [1, 128], strides = [1, 1]} : vector<6x128xf32> to vector<1x128xf32>
    %131 = vector.broadcast %129 : vector<4x1xf32> to vector<4x128xf32>
    %132 = vector.broadcast %130 : vector<1x128xf32> to vector<4x128xf32>
    %133 = arith.mulf %131, %132 : vector<4x128xf32>
    %134 = arith.addf %128, %133 : vector<4x128xf32>
    %135 = vector.extract_strided_slice %107 {offsets = [0, 4], sizes = [4, 1], strides = [1, 1]} : vector<16x16xf32> to vector<4x1xf32>
    %136 = vector.extract_strided_slice %105 {offsets = [4, 0], sizes = [1, 128], strides = [1, 1]} : vector<6x128xf32> to vector<1x128xf32>
    %137 = vector.broadcast %135 : vector<4x1xf32> to vector<4x128xf32>
    %138 = vector.broadcast %136 : vector<1x128xf32> to vector<4x128xf32>
    %139 = arith.mulf %137, %138 : vector<4x128xf32>
    %140 = arith.addf %134, %139 : vector<4x128xf32>
    %141 = vector.extract_strided_slice %107 {offsets = [0, 5], sizes = [4, 1], strides = [1, 1]} : vector<16x16xf32> to vector<4x1xf32>
    %142 = vector.extract_strided_slice %105 {offsets = [5, 0], sizes = [1, 128], strides = [1, 1]} : vector<6x128xf32> to vector<1x128xf32>
    %143 = vector.broadcast %141 : vector<4x1xf32> to vector<4x128xf32>
    %144 = vector.broadcast %142 : vector<1x128xf32> to vector<4x128xf32>
    %145 = arith.mulf %143, %144 : vector<4x128xf32>
    %146 = arith.addf %140, %145 : vector<4x128xf32>
    %147 = vector.extract_strided_slice %146 {offsets = [0, 0], sizes = [2, 128], strides = [1, 1]} : vector<4x128xf32> to vector<2x128xf32>
    %148 = vector.extract_strided_slice %146 {offsets = [2, 0], sizes = [2, 128], strides = [1, 1]} : vector<4x128xf32> to vector<2x128xf32>
    %cst_11 = arith.constant 5.000000e-01 : f32
    %149 = vector.broadcast %cst_11 : f32 to vector<2x128xf32>
    %150 = arith.mulf %149, %148 : vector<2x128xf32>
    %151 = math.exp %150 : vector<2x128xf32>
    %152 = arith.mulf %1, %151 : vector<2x128xf32>
    %153 = arith.addf %147, %152 : vector<2x128xf32>
    %c3 = arith.constant 3 : index
    %c0_12 = arith.constant 0 : index
    %c0_13 = arith.constant 0 : index
    %154 = vector.load %arg3[%c3, %c0_12, %c0_13] : memref<6x16x16xf32, #tpu.memory_space<vmem>>, vector<1x16x16xf32>
    %155 = vector.shape_cast %154 : vector<1x16x16xf32> to vector<16x16xf32>
    %156 = vector.extract_strided_slice %155 {offsets = [0, 2], sizes = [6, 1], strides = [1, 1]} : vector<16x16xf32> to vector<6x1xf32>
    %157 = vector.shape_cast %156 : vector<6x1xf32> to vector<6x1xf32>
    %158 = vector.broadcast %157 : vector<6x1xf32> to vector<6x128xf32>
    %159 = vector.extract_strided_slice %155 {offsets = [0, 0], sizes = [6, 1], strides = [1, 1]} : vector<16x16xf32> to vector<6x1xf32>
    %160 = vector.extract_strided_slice %153 {offsets = [0, 0], sizes = [1, 128], strides = [1, 1]} : vector<2x128xf32> to vector<1x128xf32>
    %161 = vector.broadcast %159 : vector<6x1xf32> to vector<6x128xf32>
    %162 = vector.broadcast %160 : vector<1x128xf32> to vector<6x128xf32>
    %163 = arith.mulf %161, %162 : vector<6x128xf32>
    %164 = arith.addf %158, %163 : vector<6x128xf32>
    %165 = vector.extract_strided_slice %155 {offsets = [0, 1], sizes = [6, 1], strides = [1, 1]} : vector<16x16xf32> to vector<6x1xf32>
    %166 = vector.extract_strided_slice %153 {offsets = [1, 0], sizes = [1, 128], strides = [1, 1]} : vector<2x128xf32> to vector<1x128xf32>
    %167 = vector.broadcast %165 : vector<6x1xf32> to vector<6x128xf32>
    %168 = vector.broadcast %166 : vector<1x128xf32> to vector<6x128xf32>
    %169 = arith.mulf %167, %168 : vector<6x128xf32>
    %170 = arith.addf %164, %169 : vector<6x128xf32>
    %cst_14 = arith.constant 0.000000e+00 : f32
    %171 = vector.broadcast %cst_14 : f32 to vector<6x128xf32>
    %172 = arith.maximumf %170, %171 : vector<6x128xf32>
    %c4 = arith.constant 4 : index
    %c0_15 = arith.constant 0 : index
    %c0_16 = arith.constant 0 : index
    %173 = vector.load %arg3[%c4, %c0_15, %c0_16] : memref<6x16x16xf32, #tpu.memory_space<vmem>>, vector<1x16x16xf32>
    %174 = vector.shape_cast %173 : vector<1x16x16xf32> to vector<16x16xf32>
    %175 = vector.extract_strided_slice %174 {offsets = [0, 6], sizes = [9, 1], strides = [1, 1]} : vector<16x16xf32> to vector<9x1xf32>
    %176 = vector.shape_cast %175 : vector<9x1xf32> to vector<9x1xf32>
    %177 = vector.broadcast %176 : vector<9x1xf32> to vector<9x128xf32>
    %178 = vector.extract_strided_slice %174 {offsets = [0, 0], sizes = [9, 1], strides = [1, 1]} : vector<16x16xf32> to vector<9x1xf32>
    %179 = vector.extract_strided_slice %172 {offsets = [0, 0], sizes = [1, 128], strides = [1, 1]} : vector<6x128xf32> to vector<1x128xf32>
    %180 = vector.broadcast %178 : vector<9x1xf32> to vector<9x128xf32>
    %181 = vector.broadcast %179 : vector<1x128xf32> to vector<9x128xf32>
    %182 = arith.mulf %180, %181 : vector<9x128xf32>
    %183 = arith.addf %177, %182 : vector<9x128xf32>
    %184 = vector.extract_strided_slice %174 {offsets = [0, 1], sizes = [9, 1], strides = [1, 1]} : vector<16x16xf32> to vector<9x1xf32>
    %185 = vector.extract_strided_slice %172 {offsets = [1, 0], sizes = [1, 128], strides = [1, 1]} : vector<6x128xf32> to vector<1x128xf32>
    %186 = vector.broadcast %184 : vector<9x1xf32> to vector<9x128xf32>
    %187 = vector.broadcast %185 : vector<1x128xf32> to vector<9x128xf32>
    %188 = arith.mulf %186, %187 : vector<9x128xf32>
    %189 = arith.addf %183, %188 : vector<9x128xf32>
    %190 = vector.extract_strided_slice %174 {offsets = [0, 2], sizes = [9, 1], strides = [1, 1]} : vector<16x16xf32> to vector<9x1xf32>
    %191 = vector.extract_strided_slice %172 {offsets = [2, 0], sizes = [1, 128], strides = [1, 1]} : vector<6x128xf32> to vector<1x128xf32>
    %192 = vector.broadcast %190 : vector<9x1xf32> to vector<9x128xf32>
    %193 = vector.broadcast %191 : vector<1x128xf32> to vector<9x128xf32>
    %194 = arith.mulf %192, %193 : vector<9x128xf32>
    %195 = arith.addf %189, %194 : vector<9x128xf32>
    %196 = vector.extract_strided_slice %174 {offsets = [0, 3], sizes = [9, 1], strides = [1, 1]} : vector<16x16xf32> to vector<9x1xf32>
    %197 = vector.extract_strided_slice %172 {offsets = [3, 0], sizes = [1, 128], strides = [1, 1]} : vector<6x128xf32> to vector<1x128xf32>
    %198 = vector.broadcast %196 : vector<9x1xf32> to vector<9x128xf32>
    %199 = vector.broadcast %197 : vector<1x128xf32> to vector<9x128xf32>
    %200 = arith.mulf %198, %199 : vector<9x128xf32>
    %201 = arith.addf %195, %200 : vector<9x128xf32>
    %202 = vector.extract_strided_slice %174 {offsets = [0, 4], sizes = [9, 1], strides = [1, 1]} : vector<16x16xf32> to vector<9x1xf32>
    %203 = vector.extract_strided_slice %172 {offsets = [4, 0], sizes = [1, 128], strides = [1, 1]} : vector<6x128xf32> to vector<1x128xf32>
    %204 = vector.broadcast %202 : vector<9x1xf32> to vector<9x128xf32>
    %205 = vector.broadcast %203 : vector<1x128xf32> to vector<9x128xf32>
    %206 = arith.mulf %204, %205 : vector<9x128xf32>
    %207 = arith.addf %201, %206 : vector<9x128xf32>
    %208 = vector.extract_strided_slice %174 {offsets = [0, 5], sizes = [9, 1], strides = [1, 1]} : vector<16x16xf32> to vector<9x1xf32>
    %209 = vector.extract_strided_slice %172 {offsets = [5, 0], sizes = [1, 128], strides = [1, 1]} : vector<6x128xf32> to vector<1x128xf32>
    %210 = vector.broadcast %208 : vector<9x1xf32> to vector<9x128xf32>
    %211 = vector.broadcast %209 : vector<1x128xf32> to vector<9x128xf32>
    %212 = arith.mulf %210, %211 : vector<9x128xf32>
    %213 = arith.addf %207, %212 : vector<9x128xf32>
    %cst_17 = arith.constant 0.000000e+00 : f32
    %214 = vector.broadcast %cst_17 : f32 to vector<9x128xf32>
    %215 = arith.maximumf %213, %214 : vector<9x128xf32>
    %c5 = arith.constant 5 : index
    %c0_18 = arith.constant 0 : index
    %c0_19 = arith.constant 0 : index
    %216 = vector.load %arg3[%c5, %c0_18, %c0_19] : memref<6x16x16xf32, #tpu.memory_space<vmem>>, vector<1x16x16xf32>
    %217 = vector.shape_cast %216 : vector<1x16x16xf32> to vector<16x16xf32>
    %218 = vector.extract_strided_slice %217 {offsets = [0, 9], sizes = [6, 1], strides = [1, 1]} : vector<16x16xf32> to vector<6x1xf32>
    %219 = vector.shape_cast %218 : vector<6x1xf32> to vector<6x1xf32>
    %220 = vector.broadcast %219 : vector<6x1xf32> to vector<6x128xf32>
    %221 = vector.extract_strided_slice %217 {offsets = [0, 0], sizes = [6, 1], strides = [1, 1]} : vector<16x16xf32> to vector<6x1xf32>
    %222 = vector.extract_strided_slice %215 {offsets = [0, 0], sizes = [1, 128], strides = [1, 1]} : vector<9x128xf32> to vector<1x128xf32>
    %223 = vector.broadcast %221 : vector<6x1xf32> to vector<6x128xf32>
    %224 = vector.broadcast %222 : vector<1x128xf32> to vector<6x128xf32>
    %225 = arith.mulf %223, %224 : vector<6x128xf32>
    %226 = arith.addf %220, %225 : vector<6x128xf32>
    %227 = vector.extract_strided_slice %217 {offsets = [0, 1], sizes = [6, 1], strides = [1, 1]} : vector<16x16xf32> to vector<6x1xf32>
    %228 = vector.extract_strided_slice %215 {offsets = [1, 0], sizes = [1, 128], strides = [1, 1]} : vector<9x128xf32> to vector<1x128xf32>
    %229 = vector.broadcast %227 : vector<6x1xf32> to vector<6x128xf32>
    %230 = vector.broadcast %228 : vector<1x128xf32> to vector<6x128xf32>
    %231 = arith.mulf %229, %230 : vector<6x128xf32>
    %232 = arith.addf %226, %231 : vector<6x128xf32>
    %233 = vector.extract_strided_slice %217 {offsets = [0, 2], sizes = [6, 1], strides = [1, 1]} : vector<16x16xf32> to vector<6x1xf32>
    %234 = vector.extract_strided_slice %215 {offsets = [2, 0], sizes = [1, 128], strides = [1, 1]} : vector<9x128xf32> to vector<1x128xf32>
    %235 = vector.broadcast %233 : vector<6x1xf32> to vector<6x128xf32>
    %236 = vector.broadcast %234 : vector<1x128xf32> to vector<6x128xf32>
    %237 = arith.mulf %235, %236 : vector<6x128xf32>
    %238 = arith.addf %232, %237 : vector<6x128xf32>
    %239 = vector.extract_strided_slice %217 {offsets = [0, 3], sizes = [6, 1], strides = [1, 1]} : vector<16x16xf32> to vector<6x1xf32>
    %240 = vector.extract_strided_slice %215 {offsets = [3, 0], sizes = [1, 128], strides = [1, 1]} : vector<9x128xf32> to vector<1x128xf32>
    %241 = vector.broadcast %239 : vector<6x1xf32> to vector<6x128xf32>
    %242 = vector.broadcast %240 : vector<1x128xf32> to vector<6x128xf32>
    %243 = arith.mulf %241, %242 : vector<6x128xf32>
    %244 = arith.addf %238, %243 : vector<6x128xf32>
    %245 = vector.extract_strided_slice %217 {offsets = [0, 4], sizes = [6, 1], strides = [1, 1]} : vector<16x16xf32> to vector<6x1xf32>
    %246 = vector.extract_strided_slice %215 {offsets = [4, 0], sizes = [1, 128], strides = [1, 1]} : vector<9x128xf32> to vector<1x128xf32>
    %247 = vector.broadcast %245 : vector<6x1xf32> to vector<6x128xf32>
    %248 = vector.broadcast %246 : vector<1x128xf32> to vector<6x128xf32>
    %249 = arith.mulf %247, %248 : vector<6x128xf32>
    %250 = arith.addf %244, %249 : vector<6x128xf32>
    %251 = vector.extract_strided_slice %217 {offsets = [0, 5], sizes = [6, 1], strides = [1, 1]} : vector<16x16xf32> to vector<6x1xf32>
    %252 = vector.extract_strided_slice %215 {offsets = [5, 0], sizes = [1, 128], strides = [1, 1]} : vector<9x128xf32> to vector<1x128xf32>
    %253 = vector.broadcast %251 : vector<6x1xf32> to vector<6x128xf32>
    %254 = vector.broadcast %252 : vector<1x128xf32> to vector<6x128xf32>
    %255 = arith.mulf %253, %254 : vector<6x128xf32>
    %256 = arith.addf %250, %255 : vector<6x128xf32>
    %257 = vector.extract_strided_slice %217 {offsets = [0, 6], sizes = [6, 1], strides = [1, 1]} : vector<16x16xf32> to vector<6x1xf32>
    %258 = vector.extract_strided_slice %215 {offsets = [6, 0], sizes = [1, 128], strides = [1, 1]} : vector<9x128xf32> to vector<1x128xf32>
    %259 = vector.broadcast %257 : vector<6x1xf32> to vector<6x128xf32>
    %260 = vector.broadcast %258 : vector<1x128xf32> to vector<6x128xf32>
    %261 = arith.mulf %259, %260 : vector<6x128xf32>
    %262 = arith.addf %256, %261 : vector<6x128xf32>
    %263 = vector.extract_strided_slice %217 {offsets = [0, 7], sizes = [6, 1], strides = [1, 1]} : vector<16x16xf32> to vector<6x1xf32>
    %264 = vector.extract_strided_slice %215 {offsets = [7, 0], sizes = [1, 128], strides = [1, 1]} : vector<9x128xf32> to vector<1x128xf32>
    %265 = vector.broadcast %263 : vector<6x1xf32> to vector<6x128xf32>
    %266 = vector.broadcast %264 : vector<1x128xf32> to vector<6x128xf32>
    %267 = arith.mulf %265, %266 : vector<6x128xf32>
    %268 = arith.addf %262, %267 : vector<6x128xf32>
    %269 = vector.extract_strided_slice %217 {offsets = [0, 8], sizes = [6, 1], strides = [1, 1]} : vector<16x16xf32> to vector<6x1xf32>
    %270 = vector.extract_strided_slice %215 {offsets = [8, 0], sizes = [1, 128], strides = [1, 1]} : vector<9x128xf32> to vector<1x128xf32>
    %271 = vector.broadcast %269 : vector<6x1xf32> to vector<6x128xf32>
    %272 = vector.broadcast %270 : vector<1x128xf32> to vector<6x128xf32>
    %273 = arith.mulf %271, %272 : vector<6x128xf32>
    %274 = arith.addf %268, %273 : vector<6x128xf32>
    %c0_20 = arith.constant 0 : index
    %c0_21 = arith.constant 0 : index
    %275 = vector.load %arg4[%c0_20, %c0_21] : memref<10x128xf32, #tpu.memory_space<vmem>>, vector<6x128xf32>
    tpu.vector_store %arg4[%c0_20, %c0_21], %274 {strides = array<i32>} : memref<10x128xf32, #tpu.memory_space<vmem>>, vector<6x128xf32>,
    %c6 = arith.constant 6 : index
    %c0_22 = arith.constant 0 : index
    %276 = vector.load %arg4[%c6, %c0_22] : memref<10x128xf32, #tpu.memory_space<vmem>>, vector<2x128xf32>
    tpu.vector_store %arg4[%c6, %c0_22], %147 {strides = array<i32>} : memref<10x128xf32, #tpu.memory_space<vmem>>, vector<2x128xf32>,
    %c8 = arith.constant 8 : index
    %c0_23 = arith.constant 0 : index
    %277 = vector.load %arg4[%c8, %c0_23] : memref<10x128xf32, #tpu.memory_space<vmem>>, vector<2x128xf32>
    tpu.vector_store %arg4[%c8, %c0_23], %148 {strides = array<i32>} : memref<10x128xf32, #tpu.memory_space<vmem>>, vector<2x128xf32>,
    return
  }
  func.func @transform_0(%arg0: i32) -> (i32, i32) {
    %c0_i32 = arith.constant 0 : i32
    %c0_i32_0 = arith.constant 0 : i32
    return %c0_i32, %arg0 : i32, i32
  }
  func.func @transform_1(%arg0: i32) -> (i32, i32) {
    %c0_i32 = arith.constant 0 : i32
    %c0_i32_0 = arith.constant 0 : i32
    return %c0_i32, %arg0 : i32, i32
  }
  func.func @transform_2(%arg0: i32) -> (i32, i32, i32) {
    %c0_i32 = arith.constant 0 : i32
    %c0_i32_0 = arith.constant 0 : i32
    %c0_i32_1 = arith.constant 0 : i32
    %c0_i32_2 = arith.constant 0 : i32
    return %c0_i32, %c0_i32_0, %c0_i32_1 : i32, i32, i32
  }
  func.func @transform_3(%arg0: i32) -> (i32, i32) {
    %c0_i32 = arith.constant 0 : i32
    %c0_i32_0 = arith.constant 0 : i32
    return %c0_i32, %arg0 : i32, i32
  }
}

</mosaic_0001>

<llo_original>
// kernel: tpu_custom_call.1
$region0: #{tpu_custom_call.1}
  #allocation0 [shape = 'u32[]', space=smem, size = 0x4, offset = 0x4, fixed_abs, tag = 'smem constant byte address 0x4 - core index']
  #allocation1 [shape = 'u32[72,128]{1,0:T(1,128)}', space=vmem, size = 0x9000, scoped, tag = 'internal scratch']
  %s0 = inlined_call_operand.hbm [shape: f32[6,128], index: 0, kind: input, shape index: {}]
  %s1 = inlined_call_operand.hbm [shape: f32[2,128], index: 1, kind: input, shape index: {}]
  %s2 = inlined_call_operand.hbm [shape: f32[6,16,16], index: 2, kind: input, shape index: {}]
  %s3 = inlined_call_operand.hbm [shape: f32[10,128], index: 3, kind: output, shape index: {}]
  %s4 = sld [smem:[#allocation0]]
  $region34: #{tpu_custom_call.1} parent=0
    _
  %s6 = ssub.s32 1, %s4
  %s7 = scalar_select 0, %s6, %s4
  $region1: #{tpu_custom_call.1} parent=0
    #allocation2 [shape = 'u8[4096]{0}', space=vmem, size = 0x1000, scoped, tag = 'input window, operand 0, single buffered']
    #allocation3 [shape = 's32[1]{0}', space=sflag, size = 0x4, scoped, tag = 'scoped memory for tpu_custom_call.1']
    #allocation4 [shape = 's32[1]{0}', space=sflag, size = 0x4, scoped, tag = 'scoped memory for tpu_custom_call.1']
    #allocation5 [shape = 'u8[1024]{0}', space=vmem, size = 0x400, scoped, tag = 'input window, operand 1, single buffered']
    #allocation6 [shape = 's32[1]{0}', space=sflag, size = 0x4, scoped, tag = 'scoped memory for tpu_custom_call.1']
    #allocation7 [shape = 'u8[49152]{0}', space=vmem, size = 0xc000, scoped, tag = 'input window, operand 2, single buffered']
    #allocation8 [shape = 'u8[8192]{0}', space=vmem, size = 0x2000, scoped, tag = 'output window, operand 0, single buffered']
    %8 = vsyncpa [#allocation3], 0
    %9 = vsyncpa [#allocation6], 0
    %10 = vsyncpa [#allocation4], 0
    // Predicated region
    $region2: #{tpu_custom_call.1} parent=1 // pred_check
      _
    $region3: #{tpu_custom_call.1} parent=1 // pred_check_branch
      %12 = sbr.rel (0) target = $region5
    $region4: #{tpu_custom_call.1} parent=1 // pred_region
      %14 = vsyncadd [#allocation3], 0
      %s16 = sshll.u32 %s0, 4
      %s17 = int_to_ptr.hbm [resolvable:$true] %s16
      %s18 = sshll.u32 [#allocation2], 4
      %s19 = int_to_ptr.vmem [resolvable:$true] %s18
      %21 = dma.hbm_to_vmem [thread:$0]  %s17, 128, %s19, [#allocation3]
    $region5: #{tpu_custom_call.1} parent=1 // pred_fallthru
      _
    // Predicated region
    $region6: #{tpu_custom_call.1} parent=1 // pred_check
      _
    $region7: #{tpu_custom_call.1} parent=1 // pred_check_branch
      %23 = sbr.rel (0) target = $region9
    $region8: #{tpu_custom_call.1} parent=1 // pred_region
      %25 = vsyncadd [#allocation6], 0
      %s27 = sshll.u32 %s1, 4
      %s28 = int_to_ptr.hbm [resolvable:$true] %s27
      %s29 = sshll.u32 [#allocation5], 4
      %s30 = int_to_ptr.vmem [resolvable:$true] %s29
      %32 = dma.hbm_to_vmem [thread:$0]  %s28, 32, %s30, [#allocation6]
    $region9: #{tpu_custom_call.1} parent=1 // pred_fallthru
      _
    // Predicated region
    $region10: #{tpu_custom_call.1} parent=1 // pred_check
      _
    $region11: #{tpu_custom_call.1} parent=1 // pred_check_branch
      %34 = sbr.rel (0) target = $region13
    $region12: #{tpu_custom_call.1} parent=1 // pred_region
      %36 = vsyncadd [#allocation6], 0
      %s37 = sshll.u32 %s2, 4
      %s38 = int_to_ptr.hbm [resolvable:$true] %s37
      %s39 = sshll.u32 [#allocation7], 4
      %s40 = int_to_ptr.vmem [resolvable:$true] %s39
      %45 = dma.hbm_to_vmem [thread:$0]  %s38, 1536, %s40, [#allocation6], 128, 128, 8
    $region13: #{tpu_custom_call.1} parent=1 // pred_fallthru
      _
    // Predicated region
    $region14: #{tpu_custom_call.1} parent=1 // pred_check
      _
    $region15: #{tpu_custom_call.1} parent=1 // pred_check_branch
      %47 = sbr.rel (0) target = $region17
    $region16: #{tpu_custom_call.1} parent=1 // pred_region
      %49 = dma.done [#allocation3], 128
    $region17: #{tpu_custom_call.1} parent=1 // pred_fallthru
      _
    // Predicated region
    $region18: #{tpu_custom_call.1} parent=1 // pred_check
      _
    $region19: #{tpu_custom_call.1} parent=1 // pred_check_branch
      %51 = sbr.rel (0) target = $region21
    $region20: #{tpu_custom_call.1} parent=1 // pred_region
      %53 = dma.done [#allocation6], 32
    $region21: #{tpu_custom_call.1} parent=1 // pred_fallthru
      _
    // Predicated region
    $region22: #{tpu_custom_call.1} parent=1 // pred_check
      _
    $region23: #{tpu_custom_call.1} parent=1 // pred_check_branch
      %55 = sbr.rel (0) target = $region25
    $region24: #{tpu_custom_call.1} parent=1 // pred_region
      %57 = dma.done [#allocation6], 1536
    $region25: #{tpu_custom_call.1} parent=1 // pred_fallthru
      _
    %v58 = vld [vmem:[#allocation2] sm:$0x3f]
    %v59 = vld [vmem:[#allocation5] sm:$0x3]
    %v60 = vld [vmem:[#allocation7] sm:$0xff]
    %v61 = vld [vmem:[#allocation7 + $0x8] sm:$0xff]
    %63 = vset.pattern.permute.xlu0 6
    %64 = vperm.xlu0 %63, %v60
    %v65 = vpop.permute.xlu0 %64
    %68 = vset.pattern.permute.xlu0 6
    %69 = vperm.xlu0 %68, %v61
    %v70 = vpop.permute.xlu0 %69
    %72 = vset.pattern.permute.xlu0 0
    %73 = vperm.xlu0 %72, %v60
    %v74 = vpop.permute.xlu0 %73
    %76 = vset.pattern.permute.xlu0 0
    %77 = vperm.xlu0 %76, %v61
    %v78 = vpop.permute.xlu0 %77
    %v80 = vperm.slane %v58, 0
    %v81 = vmul.f32 %v74, %v80
    %v82 = vmul.f32 %v78, %v80
    %v83 = vadd.f32 %v65, %v81
    %v84 = vadd.f32 %v70, %v82
    %85 = vset.pattern.permute.xlu0 1
    %86 = vperm.xlu0 %85, %v60
    %v87 = vpop.permute.xlu0 %86
    %89 = vset.pattern.permute.xlu0 1
    %90 = vperm.xlu0 %89, %v61
    %v91 = vpop.permute.xlu0 %90
    %v93 = vperm.slane %v58, 1
    %v94 = vmul.f32 %v87, %v93
    %v95 = vmul.f32 %v91, %v93
    %v96 = vadd.f32 %v83, %v94
    %v97 = vadd.f32 %v84, %v95
    %98 = vset.pattern.permute.xlu0 2
    %99 = vperm.xlu0 %98, %v60
    %v100 = vpop.permute.xlu0 %99
    %102 = vset.pattern.permute.xlu0 2
    %103 = vperm.xlu0 %102, %v61
    %v104 = vpop.permute.xlu0 %103
    %v106 = vperm.slane %v58, 2
    %v107 = vmul.f32 %v100, %v106
    %v108 = vmul.f32 %v104, %v106
    %v109 = vadd.f32 %v96, %v107
    %v110 = vadd.f32 %v97, %v108
    %111 = vset.pattern.permute.xlu0 3
    %112 = vperm.xlu0 %111, %v60
    %v113 = vpop.permute.xlu0 %112
    %115 = vset.pattern.permute.xlu0 3
    %116 = vperm.xlu0 %115, %v61
    %v117 = vpop.permute.xlu0 %116
    %v119 = vperm.slane %v58, 3
    %v120 = vmul.f32 %v113, %v119
    %v121 = vmul.f32 %v117, %v119
    %v122 = vadd.f32 %v109, %v120
    %v123 = vadd.f32 %v110, %v121
    %124 = vset.pattern.permute.xlu0 4
    %125 = vperm.xlu0 %124, %v60
    %v126 = vpop.permute.xlu0 %125
    %128 = vset.pattern.permute.xlu0 4
    %129 = vperm.xlu0 %128, %v61
    %v130 = vpop.permute.xlu0 %129
    %v132 = vperm.slane %v58, 4
    %v133 = vmul.f32 %v126, %v132
    %v134 = vmul.f32 %v130, %v132
    %v135 = vadd.f32 %v122, %v133
    %v136 = vadd.f32 %v123, %v134
    %137 = vset.pattern.permute.xlu0 5
    %138 = vperm.xlu0 %137, %v60
    %v139 = vpop.permute.xlu0 %138
    %141 = vset.pattern.permute.xlu0 5
    %142 = vperm.xlu0 %141, %v61
    %v143 = vpop.permute.xlu0 %142
    %v145 = vperm.slane %v58, 5
    %v146 = vmul.f32 %v139, %v145
    %v147 = vmul.f32 %v143, %v145
    %v148 = vadd.f32 %v135, %v146
    %v149 = vadd.f32 %v136, %v147
    %v150 = vmax.f32 %v148, 0.0
    %v151 = vmax.f32 %v149, 0.0
    %s152 = scalar_lea.vmem [#allocation7], 16
    %v153 = vld [vmem:[%s152] sm:$0xff]
    %155 = vset.pattern.permute.xlu0 9
    %156 = vperm.xlu0 %155, %v153
    %v157 = vpop.permute.xlu0 %156
    %159 = vset.pattern.permute.xlu0 0
    %160 = vperm.xlu0 %159, %v153
    %v161 = vpop.permute.xlu0 %160
    %v163 = vperm.slane %v150, 0
    %v164 = vmul.f32 %v161, %v163
    %v165 = vadd.f32 %v157, %v164
    %166 = vset.pattern.permute.xlu0 1
    %167 = vperm.xlu0 %166, %v153
    %v168 = vpop.permute.xlu0 %167
    %v170 = vperm.slane %v150, 1
    %v171 = vmul.f32 %v168, %v170
    %v172 = vadd.f32 %v165, %v171
    %173 = vset.pattern.permute.xlu0 2
    %174 = vperm.xlu0 %173, %v153
    %v175 = vpop.permute.xlu0 %174
    %v177 = vperm.slane %v150, 2
    %v178 = vmul.f32 %v175, %v177
    %v179 = vadd.f32 %v172, %v178
    %180 = vset.pattern.permute.xlu0 3
    %181 = vperm.xlu0 %180, %v153
    %v182 = vpop.permute.xlu0 %181
    %v184 = vperm.slane %v150, 3
    %v185 = vmul.f32 %v182, %v184
    %v186 = vadd.f32 %v179, %v185
    %187 = vset.pattern.permute.xlu0 4
    %188 = vperm.xlu0 %187, %v153
    %v189 = vpop.permute.xlu0 %188
    %v191 = vperm.slane %v150, 4
    %v192 = vmul.f32 %v189, %v191
    %v193 = vadd.f32 %v186, %v192
    %194 = vset.pattern.permute.xlu0 5
    %195 = vperm.xlu0 %194, %v153
    %v196 = vpop.permute.xlu0 %195
    %v198 = vperm.slane %v150, 5
    %v199 = vmul.f32 %v196, %v198
    %v200 = vadd.f32 %v193, %v199
    %201 = vset.pattern.permute.xlu0 6
    %202 = vperm.xlu0 %201, %v153
    %v203 = vpop.permute.xlu0 %202
    %v205 = vperm.slane %v150, 6
    %v206 = vmul.f32 %v203, %v205
    %v207 = vadd.f32 %v200, %v206
    %208 = vset.pattern.permute.xlu0 7
    %209 = vperm.xlu0 %208, %v153
    %v210 = vpop.permute.xlu0 %209
    %v212 = vperm.slane %v150, 7
    %v213 = vmul.f32 %v210, %v212
    %v214 = vadd.f32 %v207, %v213
    %215 = vset.pattern.permute.xlu0 8
    %216 = vperm.xlu0 %215, %v153
    %v217 = vpop.permute.xlu0 %216
    %v219 = vperm.slane %v151, 0
    %v220 = vmul.f32 %v217, %v219
    %v221 = vadd.f32 %v214, %v220
    %v222 = vmax.f32 %v221, 0.0
    %s223 = scalar_lea.vmem [#allocation7], 32
    %v224 = vld [vmem:[%s223] sm:$0xff]
    %226 = vset.pattern.permute.xlu0 6
    %227 = vperm.xlu0 %226, %v224
    %v228 = vpop.permute.xlu0 %227
    %230 = vset.pattern.permute.xlu0 0
    %231 = vperm.xlu0 %230, %v224
    %v232 = vpop.permute.xlu0 %231
    %v234 = vperm.slane %v222, 0
    %v235 = vmul.f32 %v232, %v234
    %v236 = vadd.f32 %v228, %v235
    %237 = vset.pattern.permute.xlu0 1
    %238 = vperm.xlu0 %237, %v224
    %v239 = vpop.permute.xlu0 %238
    %v241 = vperm.slane %v222, 1
    %v242 = vmul.f32 %v239, %v241
    %v243 = vadd.f32 %v236, %v242
    %244 = vset.pattern.permute.xlu0 2
    %245 = vperm.xlu0 %244, %v224
    %v246 = vpop.permute.xlu0 %245
    %v248 = vperm.slane %v222, 2
    %v249 = vmul.f32 %v246, %v248
    %v250 = vadd.f32 %v243, %v249
    %251 = vset.pattern.permute.xlu0 3
    %252 = vperm.xlu0 %251, %v224
    %v253 = vpop.permute.xlu0 %252
    %v255 = vperm.slane %v222, 3
    %v256 = vmul.f32 %v253, %v255
    %v257 = vadd.f32 %v250, %v256
    %258 = vset.pattern.permute.xlu0 4
    %259 = vperm.xlu0 %258, %v224
    %v260 = vpop.permute.xlu0 %259
    %v262 = vperm.slane %v222, 4
    %v263 = vmul.f32 %v260, %v262
    %v264 = vadd.f32 %v257, %v263
    %265 = vset.pattern.permute.xlu0 5
    %266 = vperm.xlu0 %265, %v224
    %v267 = vpop.permute.xlu0 %266
    %v269 = vperm.slane %v222, 5
    %v270 = vmul.f32 %v267, %v269
    %v271 = vadd.f32 %v264, %v270
    %v272 = vmul.f32 %v271, 0.5
    %v273 = vmul.f32 %v272, 1.442695
    %v274 = vpow.pop %v273
    %v276 = vrot.slane %v274, 2
    %v278 = vmul.f32 %v59, %v276
    %v279 = vadd.f32 %v271, %v278
    %s280 = scalar_lea.vmem [#allocation7], 48
    %v281 = vld [vmem:[%s280] sm:$0xff]
    %283 = vset.pattern.permute.xlu0 2
    %284 = vperm.xlu0 %283, %v281
    %v285 = vpop.permute.xlu0 %284
    %287 = vset.pattern.permute.xlu0 0
    %288 = vperm.xlu0 %287, %v281
    %v289 = vpop.permute.xlu0 %288
    %v291 = vperm.slane %v279, 0
    %v292 = vmul.f32 %v289, %v291
    %v293 = vadd.f32 %v285, %v292
    %294 = vset.pattern.permute.xlu0 1
    %295 = vperm.xlu0 %294, %v281
    %v296 = vpop.permute.xlu0 %295
    %v298 = vperm.slane %v279, 1
    %v299 = vmul.f32 %v296, %v298
    %v300 = vadd.f32 %v293, %v299
    %v301 = vmax.f32 %v300, 0.0
    %s302 = scalar_lea.vmem [#allocation7], 64
    %v303 = vld [vmem:[%s302] sm:$0xff]
    %v304 = vld [vmem:[%s302 + $0x8] sm:$0xff]
    %306 = vset.pattern.permute.xlu0 6
    %307 = vperm.xlu0 %306, %v303
    %v308 = vpop.permute.xlu0 %307
    %311 = vset.pattern.permute.xlu0 6
    %312 = vperm.xlu0 %311, %v304
    %v313 = vpop.permute.xlu0 %312
    %315 = vset.pattern.permute.xlu0 0
    %316 = vperm.xlu0 %315, %v303
    %v317 = vpop.permute.xlu0 %316
    %319 = vset.pattern.permute.xlu0 0
    %320 = vperm.xlu0 %319, %v304
    %v321 = vpop.permute.xlu0 %320
    %v323 = vperm.slane %v301, 0
    %v324 = vmul.f32 %v317, %v323
    %v325 = vmul.f32 %v321, %v323
    %v326 = vadd.f32 %v308, %v324
    %v327 = vadd.f32 %v313, %v325
    %328 = vset.pattern.permute.xlu0 1
    %329 = vperm.xlu0 %328, %v303
    %v330 = vpop.permute.xlu0 %329
    %332 = vset.pattern.permute.xlu0 1
    %333 = vperm.xlu0 %332, %v304
    %v334 = vpop.permute.xlu0 %333
    %v336 = vperm.slane %v301, 1
    %v337 = vmul.f32 %v330, %v336
    %v338 = vmul.f32 %v334, %v336
    %v339 = vadd.f32 %v326, %v337
    %v340 = vadd.f32 %v327, %v338
    %341 = vset.pattern.permute.xlu0 2
    %342 = vperm.xlu0 %341, %v303
    %v343 = vpop.permute.xlu0 %342
    %345 = vset.pattern.permute.xlu0 2
    %346 = vperm.xlu0 %345, %v304
    %v347 = vpop.permute.xlu0 %346
    %v349 = vperm.slane %v301, 2
    %v350 = vmul.f32 %v343, %v349
    %v351 = vmul.f32 %v347, %v349
    %v352 = vadd.f32 %v339, %v350
    %v353 = vadd.f32 %v340, %v351
    %354 = vset.pattern.permute.xlu0 3
    %355 = vperm.xlu0 %354, %v303
    %v356 = vpop.permute.xlu0 %355
    %358 = vset.pattern.permute.xlu0 3
    %359 = vperm.xlu0 %358, %v304
    %v360 = vpop.permute.xlu0 %359
    %v362 = vperm.slane %v301, 3
    %v363 = vmul.f32 %v356, %v362
    %v364 = vmul.f32 %v360, %v362
    %v365 = vadd.f32 %v352, %v363
    %v366 = vadd.f32 %v353, %v364
    %367 = vset.pattern.permute.xlu0 4
    %368 = vperm.xlu0 %367, %v303
    %v369 = vpop.permute.xlu0 %368
    %371 = vset.pattern.permute.xlu0 4
    %372 = vperm.xlu0 %371, %v304
    %v373 = vpop.permute.xlu0 %372
    %v375 = vperm.slane %v301, 4
    %v376 = vmul.f32 %v369, %v375
    %v377 = vmul.f32 %v373, %v375
    %v378 = vadd.f32 %v365, %v376
    %v379 = vadd.f32 %v366, %v377
    %380 = vset.pattern.permute.xlu0 5
    %381 = vperm.xlu0 %380, %v303
    %v382 = vpop.permute.xlu0 %381
    %384 = vset.pattern.permute.xlu0 5
    %385 = vperm.xlu0 %384, %v304
    %v386 = vpop.permute.xlu0 %385
    %v388 = vperm.slane %v301, 5
    %v389 = vmul.f32 %v382, %v388
    %v390 = vmul.f32 %v386, %v388
    %v391 = vadd.f32 %v378, %v389
    %v392 = vadd.f32 %v379, %v390
    %v393 = vmax.f32 %v391, 0.0
    %v394 = vmax.f32 %v392, 0.0
    %s395 = scalar_lea.vmem [#allocation7], 80
    %v396 = vld [vmem:[%s395] sm:$0xff]
    %398 = vset.pattern.permute.xlu0 9
    %399 = vperm.xlu0 %398, %v396
    %v400 = vpop.permute.xlu0 %399
    %402 = vset.pattern.permute.xlu0 0
    %403 = vperm.xlu0 %402, %v396
    %v404 = vpop.permute.xlu0 %403
    %v406 = vperm.slane %v393, 0
    %v407 = vmul.f32 %v404, %v406
    %v408 = vadd.f32 %v400, %v407
    %409 = vset.pattern.permute.xlu0 1
    %410 = vperm.xlu0 %409, %v396
    %v411 = vpop.permute.xlu0 %410
    %v413 = vperm.slane %v393, 1
    %v414 = vmul.f32 %v411, %v413
    %v415 = vadd.f32 %v408, %v414
    %416 = vset.pattern.permute.xlu0 2
    %417 = vperm.xlu0 %416, %v396
    %v418 = vpop.permute.xlu0 %417
    %v420 = vperm.slane %v393, 2
    %v421 = vmul.f32 %v418, %v420
    %v422 = vadd.f32 %v415, %v421
    %423 = vset.pattern.permute.xlu0 3
    %424 = vperm.xlu0 %423, %v396
    %v425 = vpop.permute.xlu0 %424
    %v427 = vperm.slane %v393, 3
    %v428 = vmul.f32 %v425, %v427
    %v429 = vadd.f32 %v422, %v428
    %430 = vset.pattern.permute.xlu0 4
    %431 = vperm.xlu0 %430, %v396
    %v432 = vpop.permute.xlu0 %431
    %v434 = vperm.slane %v393, 4
    %v435 = vmul.f32 %v432, %v434
    %v436 = vadd.f32 %v429, %v435
    %437 = vset.pattern.permute.xlu0 5
    %438 = vperm.xlu0 %437, %v396
    %v439 = vpop.permute.xlu0 %438
    %v441 = vperm.slane %v393, 5
    %v442 = vmul.f32 %v439, %v441
    %v443 = vadd.f32 %v436, %v442
    %444 = vset.pattern.permute.xlu0 6
    %445 = vperm.xlu0 %444, %v396
    %v446 = vpop.permute.xlu0 %445
    %v448 = vperm.slane %v393, 6
    %v449 = vmul.f32 %v446, %v448
    %v450 = vadd.f32 %v443, %v449
    %451 = vset.pattern.permute.xlu0 7
    %452 = vperm.xlu0 %451, %v396
    %v453 = vpop.permute.xlu0 %452
    %v455 = vperm.slane %v393, 7
    %v456 = vmul.f32 %v453, %v455
    %v457 = vadd.f32 %v450, %v456
    %458 = vset.pattern.permute.xlu0 8
    %459 = vperm.xlu0 %458, %v396
    %v460 = vpop.permute.xlu0 %459
    %v462 = vperm.slane %v394, 0
    %v463 = vmul.f32 %v460, %v462
    %v464 = vadd.f32 %v457, %v463
    %465 = vst [vmem:[#allocation8] sm:$0x3f] %v464
    %466 = vst [vmem:[#allocation8 + $0x6] sm:$0x3] %v271
    %467 = vst [vmem:[#allocation8 + $0x6] sm:$0xc] %v271
    // Predicated region
    $region26: #{tpu_custom_call.1} parent=1 // pred_check
      _
    $region27: #{tpu_custom_call.1} parent=1 // pred_check_branch
      %469 = sbr.rel (0) target = $region29
    $region28: #{tpu_custom_call.1} parent=1 // pred_region
      %471 = vsyncadd [#allocation4], 0
      %s472 = sshll.u32 [#allocation8], 4
      %s473 = int_to_ptr.vmem [resolvable:$true] %s472
      %s474 = sshll.u32 %s3, 4
      %s475 = int_to_ptr.hbm [resolvable:$true] %s474
      %480 = dma.vmem_to_hbm [thread:$0]  %s473, 256, %s475, [#allocation4], 128, 128, 8
    $region29: #{tpu_custom_call.1} parent=1 // pred_fallthru
      _
    // Predicated region
    $region30: #{tpu_custom_call.1} parent=1 // pred_check
      _
    $region31: #{tpu_custom_call.1} parent=1 // pred_check_branch
      %482 = sbr.rel (0) target = $region33
    $region32: #{tpu_custom_call.1} parent=1 // pred_region
      %484 = dma.done [#allocation4], 256
    $region33: #{tpu_custom_call.1} parent=1 // pred_fallthru
      _
    %485 = vsyncpa [#allocation3], 1
    %486 = vsyncpa [#allocation6], 1
    %487 = vsyncpa [#allocation4], 1

</llo_original>
